<compile_context>
chip_gen: v7x
topology: tpu7x:2x2x1
jax: 0.10.0
libtpu: 0.0.40
codegen_flags: <defaults>
</compile_context>

<pallas_src>
import jax
import jax.numpy as jnp
from jax.experimental import pallas as pl
from jax.experimental.pallas import tpu as pltpu


# ----------------------------------------------------------------------------
# Kernel
# ----------------------------------------------------------------------------
def _bayes_linear_kernel(x_ref, w_mu_ref, w_var_ref, side_ref, o_ref,
                         acc_mu_ref, acc_var_ref):
    k = pl.program_id(2)

    @pl.when(k == 0)
    def _():
        acc_mu_ref[...] = jnp.zeros_like(acc_mu_ref)
        acc_var_ref[...] = jnp.zeros_like(acc_var_ref)

    x = x_ref[...]                                        # (tb, tk) compute dtype
    acc_mu_ref[...] += jnp.dot(x, w_mu_ref[...],
                               preferred_element_type=jnp.float32)
    acc_var_ref[...] += jnp.dot(x * x, w_var_ref[...],
                                preferred_element_type=jnp.float32)

    @pl.when(k == pl.num_programs(2) - 1)
    def _():
        side = side_ref[...]                              # (3, tn) f32
        gamma = acc_mu_ref[...] + side[0:1, :]            # + b_mu
        delta = jnp.maximum(acc_var_ref[...] + side[1:2, :], 0.0)  # + b_var, >=0
        # side[2] already holds zeta * weight_out.
        o_ref[...] = (gamma + jnp.sqrt(delta) * side[2:3, :]).astype(o_ref.dtype)


# ----------------------------------------------------------------------------
# Helpers
# ----------------------------------------------------------------------------
def _round_up(x, m):
    return ((x + m - 1) // m) * m


def _pad_cast_2d(a, rows, cols, dtype):
    """Cast + zero-pad a 2-D array to (rows, cols). No-op (no HBM copy) if the
    array is already that shape and dtype."""
    if a.dtype != dtype:
        a = a.astype(dtype)
    pr, pc = rows - a.shape[0], cols - a.shape[1]
    if pr or pc:
        a = jnp.pad(a, ((0, pr), (0, pc)))
    return a


def rho2var(rho):
    # var = softplus(rho)^2, numerically-safe version of torch.log(1+exp(rho))^2.
    return jax.nn.softplus(rho) ** 2


def prepare_weights(w_mu, w_var, *, block_n=512, block_k=1024,
                    compute_dtype=jnp.bfloat16):
    """Pad + cast the two (fan_in, fan_out) weight matrices once at init time.

    Passing the returned (cached) arrays to bayesian_linear_forward skips the
    per-call pad/cast HBM copies of the weights."""
    K, N = w_mu.shape
    tk = min(block_k, _round_up(K, 128))
    tn = min(block_n, _round_up(N, 128))
    Kp, Np = _round_up(K, tk), _round_up(N, tn)
    return (_pad_cast_2d(w_mu, Kp, Np, compute_dtype),
            _pad_cast_2d(w_var, Kp, Np, compute_dtype))


# ----------------------------------------------------------------------------
# Forward wrapper
# ----------------------------------------------------------------------------
def bayesian_linear_forward(x, w_mu, w_var, b_mu, b_var, zeta, *,
                            weight_out=0.1,
                            block_batch=512, block_n=512, block_k=1024,
                            compute_dtype=jnp.bfloat16,
                            out_dtype=jnp.float32,
                            weight_buffers=2):
    """r = (X @ W_mu + b_mu) + sqrt(X^2 @ W_var + b_var) * zeta * weight_out

    x          : (B, fan_in)
    w_mu/w_var : (fan_in, fan_out). May already be padded/cast via
                 prepare_weights(); in that case no extra HBM copy happens.
    b_mu/b_var : (fan_out,)   (true, un-padded fan_out)
    zeta       : (fan_out,) or (1, fan_out), N(0,1), shared across the batch.
    Returns (B, fan_out) in out_dtype (default float32)."""
    B, K = x.shape
    Kw, Nw = w_mu.shape
    N = int(b_mu.reshape(-1).shape[0])            # true fan_out (biases un-padded)

    # Tile sizes: as large as the (padded) problem allows, MXU-shaped.
    tk = min(block_k, _round_up(Kw, 128))
    tn = min(block_n, _round_up(Nw, 128))
    tb = min(block_batch, _round_up(B, 8))

    Kp = _round_up(Kw, tk)
    Np = _round_up(Nw, tn)

    # v7x megacore: if the grid would collapse to one tile on both parallel
    # axes, split one of them so the second TensorCore isn't idle.
    if _round_up(B, 8) <= tb and Np <= tn:
        if Np >= 256 and Np % 256 == 0:
            tn = Np // 2
        elif _round_up(B, 8) >= 16:
            tb = _round_up((_round_up(B, 8) + 1) // 2, 8)

    Bp = _round_up(B, tb)

    # Pad/cast (no-ops when the caller passed pre-prepared weights).
    xp = _pad_cast_2d(x, Bp, Kp, compute_dtype)
    w_mu_p = _pad_cast_2d(w_mu, Kp, Np, compute_dtype)
    w_var_p = _pad_cast_2d(w_var, Kp, Np, compute_dtype)

    # One (3, Np) f32 side input: [b_mu; b_var; zeta * weight_out].
    side = jnp.stack([
        b_mu.astype(jnp.float32).reshape(-1),
        b_var.astype(jnp.float32).reshape(-1),
        zeta.astype(jnp.float32).reshape(-1) * jnp.float32(weight_out),
    ], axis=0)
    if Np > N:
        side = jnp.pad(side, ((0, 0), (0, Np - N)))

    grid = (Bp // tb, Np // tn, Kp // tk)

    # Weight BlockSpec; optional deeper buffering (e.g. 3 on v5e if DMA exposed).
    def _wspec():
        if weight_buffers and weight_buffers != 2:
            return pl.BlockSpec((tk, tn), lambda i, j, k: (k, j),
                                pipeline_mode=pl.Buffered(weight_buffers))
        return pl.BlockSpec((tk, tn), lambda i, j, k: (k, j))

    in_item = jnp.dtype(compute_dtype).itemsize
    out_item = jnp.dtype(out_dtype).itemsize

    # Per-step footprint (double-buffered inputs/outputs + two f32 accumulators),
    # with headroom; v5e's scoped default is only 16 MiB, v7x physical is 64 MiB.
    vmem_est = (2 * (tb * tk * in_item + 2 * tk * tn * in_item
                     + 3 * tn * 4 + tb * tn * out_item)
                + 2 * tb * tn * 4)
    vmem_limit = int(min(max(vmem_est * 3 // 2 + (4 << 20), 32 << 20), 64 << 20))

    cost = pl.CostEstimate(
        flops=2 * 2 * Bp * Kp * Np,                 # two matmuls
        transcendentals=Bp * Np,                    # sqrt per output element
        bytes_accessed=(Bp * Kp * in_item + 2 * Kp * Np * in_item
                        + 3 * Np * 4 + Bp * Np * out_item),
    )

    out = pl.pallas_call(
        _bayes_linear_kernel,
        out_shape=jax.ShapeDtypeStruct((Bp, Np), out_dtype),
        grid_spec=pltpu.PrefetchScalarGridSpec(
            num_scalar_prefetch=0,
            grid=grid,
            in_specs=[
                pl.BlockSpec((tb, tk), lambda i, j, k: (i, k)),   # X tile
                _wspec(),                                         # W_mu tile
                _wspec(),                                         # W_var tile
                pl.BlockSpec((3, tn), lambda i, j, k: (0, j)),    # [b_mu;b_var;zeta*w]
            ],
            out_specs=pl.BlockSpec((tb, tn), lambda i, j, k: (i, j)),
            scratch_shapes=[pltpu.VMEM((tb, tn), jnp.float32),    # gamma acc
                            pltpu.VMEM((tb, tn), jnp.float32)],   # delta acc
        ),
        compiler_params=pltpu.CompilerParams(
            dimension_semantics=("parallel", "parallel", "arbitrary"),
            vmem_limit_bytes=vmem_limit),
        cost_estimate=cost,
    )(xp, w_mu_p, w_var_p, side)

    return out[:B, :N]


# ----------------------------------------------------------------------------
# Self-test
# ----------------------------------------------------------------------------
if __name__ == "__main__":
    key = jax.random.PRNGKey(0)
    k_x, k_wmu, k_bmu, k_zeta = jax.random.split(key, 4)

    batch, fan_in, fan_out = 8, 32, 64
    weight_out = 0.1

    # Deterministic parameter init mirroring the module's __init__:
    #   W_mu, b_mu ~ N(0, 1);  W_rho = b_rho = log(exp(0.5) - 1)  => var = 0.25
    w_mu = jax.random.normal(k_wmu, (fan_in, fan_out), dtype=jnp.float32)
    b_mu = jax.random.normal(k_bmu, (fan_out,), dtype=jnp.float32)
    rho0 = jnp.log(jnp.exp(jnp.float32(0.5)) - 1.0)
    w_var = rho2var(jnp.full((fan_in, fan_out), rho0, dtype=jnp.float32))
    b_var = rho2var(jnp.full((fan_out,), rho0, dtype=jnp.float32))

    x = jax.random.normal(k_x, (batch, fan_in), dtype=jnp.float32)
    # zeta sampled once in the wrapper, shared across the batch
    # (share_paremeters_among_samples=True path of the module).
    zeta = jax.random.normal(k_zeta, (1, fan_out), dtype=jnp.float32)

    # Pure-JAX reference of the forward semantics.
    gamma = x @ w_mu + b_mu
    delta = (x ** 2) @ w_var + b_var
    ref = gamma + jnp.sqrt(delta) * zeta * weight_out

    # 1) f32 compute path: exact match against the reference.
    r_f32 = bayesian_linear_forward(x, w_mu, w_var, b_mu, b_var, zeta,
                                    weight_out=weight_out,
                                    compute_dtype=jnp.float32)
    r_f32 = jax.block_until_ready(r_f32)
    assert r_f32.shape == (batch, fan_out)
    assert jnp.allclose(r_f32, ref, atol=1e-4, rtol=1e-4)

    # 2) Default bf16-operand path (f32 accumulation) with cached, pre-padded
    #    weights — the fast path for repeated forward calls.
    w_mu_prep, w_var_prep = prepare_weights(w_mu, w_var)
    r_bf16 = bayesian_linear_forward(x, w_mu_prep, w_var_prep, b_mu, b_var,
                                     zeta, weight_out=weight_out)
    r_bf16 = jax.block_until_ready(r_bf16)
    assert r_bf16.shape == (batch, fan_out)
    assert jnp.allclose(r_bf16, ref, atol=3e-1, rtol=5e-2)

    # TODO(synk): parameter bookkeeping (save_old_params / get/set_parameters)
    # is host-side state management with no kernel equivalent.
    print("KERNEL_OK")
</pallas_src>

<mosaic_0001>
module attributes {stable_mosaic.version = 11 : i64} {
  func.func @_bayes_linear_kernel(%arg0: i32, %arg1: i32, %arg2: i32, %arg3: memref<8x128xf32, #tpu.memory_space<vmem>>, %arg4: memref<128x128xf32, #tpu.memory_space<vmem>>, %arg5: memref<128x128xf32, #tpu.memory_space<vmem>>, %arg6: memref<3x128xf32, #tpu.memory_space<vmem>>, %arg7: memref<8x128xf32, #tpu.memory_space<vmem>>, %arg8: memref<8x128xf32, #tpu.memory_space<vmem>>, %arg9: memref<8x128xf32, #tpu.memory_space<vmem>>) attributes {dimension_semantics = [#tpu.dimension_semantics<parallel>, #tpu.dimension_semantics<parallel>, #tpu.dimension_semantics<arbitrary>], iteration_bounds = array<i64: 1, 1, 1>, scalar_prefetch = 0 : i64, scratch_operands = 2 : i64, tpu.core_type = #tpu.core_type<tc>, window_params = [{transform_indices = @transform_0, window_bounds = array<i64: 8, 128>}, {transform_indices = @transform_1, window_bounds = array<i64: 128, 128>}, {transform_indices = @transform_2, window_bounds = array<i64: 128, 128>}, {transform_indices = @transform_3, window_bounds = array<i64: 3, 128>}, {transform_indices = @transform_4, window_bounds = array<i64: 8, 128>}]} {
    %c0_i32 = arith.constant 0 : i32
    %0 = arith.cmpi eq, %arg2, %c0_i32 : i32
    %1 = arith.extui %0 : i1 to i32
    %c0_i32_0 = arith.constant 0 : i32
    %2 = arith.cmpi ne, %1, %c0_i32_0 : i32
    scf.if %2 {
      %cst_17 = arith.constant 0.000000e+00 : f32
      %18 = vector.broadcast %cst_17 : f32 to vector<8x128xf32>
      %c0_18 = arith.constant 0 : index
      %c0_19 = arith.constant 0 : index
      %19 = vector.load %arg8[%c0_18, %c0_19] : memref<8x128xf32, #tpu.memory_space<vmem>>, vector<8x128xf32>
      tpu.vector_store %arg8[%c0_18, %c0_19], %18 {strides = array<i32>} : memref<8x128xf32, #tpu.memory_space<vmem>>, vector<8x128xf32>,
      %cst_20 = arith.constant 0.000000e+00 : f32
      %20 = vector.broadcast %cst_20 : f32 to vector<8x128xf32>
      %c0_21 = arith.constant 0 : index
      %c0_22 = arith.constant 0 : index
      %21 = vector.load %arg9[%c0_21, %c0_22] : memref<8x128xf32, #tpu.memory_space<vmem>>, vector<8x128xf32>
      tpu.vector_store %arg9[%c0_21, %c0_22], %20 {strides = array<i32>} : memref<8x128xf32, #tpu.memory_space<vmem>>, vector<8x128xf32>,
    } else {
    }
    %c0 = arith.constant 0 : index
    %c0_1 = arith.constant 0 : index
    %3 = vector.load %arg3[%c0, %c0_1] : memref<8x128xf32, #tpu.memory_space<vmem>>, vector<8x128xf32>
    %c0_2 = arith.constant 0 : index
    %c0_3 = arith.constant 0 : index
    %4 = vector.load %arg8[%c0_2, %c0_3] : memref<8x128xf32, #tpu.memory_space<vmem>>, vector<8x128xf32>
    %c0_4 = arith.constant 0 : index
    %c0_5 = arith.constant 0 : index
    %5 = vector.load %arg4[%c0_4, %c0_5] : memref<128x128xf32, #tpu.memory_space<vmem>>, vector<128x128xf32>
    %cst = arith.constant dense<0.000000e+00> : vector<8x128xf32>
    %6 = tpu.matmul %3, %5, %cst {dimension_numbers = #tpu.dot_dimension_numbers<[1], [0], [0], [1], [0, 0, 1, 1], [], []>} : vector<8x128xf32>, vector<128x128xf32>, vector<8x128xf32> -> vector<8x128xf32>
    %7 = arith.addf %4, %6 : vector<8x128xf32>
    %c0_6 = arith.constant 0 : index
    %c0_7 = arith.constant 0 : index
    %8 = vector.load %arg8[%c0_6, %c0_7] : memref<8x128xf32, #tpu.memory_space<vmem>>, vector<8x128xf32>
    tpu.vector_store %arg8[%c0_6, %c0_7], %7 {strides = array<i32>} : memref<8x128xf32, #tpu.memory_space<vmem>>, vector<8x128xf32>,
    %c0_8 = arith.constant 0 : index
    %c0_9 = arith.constant 0 : index
    %9 = vector.load %arg9[%c0_8, %c0_9] : memref<8x128xf32, #tpu.memory_space<vmem>>, vector<8x128xf32>
    %10 = arith.mulf %3, %3 : vector<8x128xf32>
    %c0_10 = arith.constant 0 : index
    %c0_11 = arith.constant 0 : index
    %11 = vector.load %arg5[%c0_10, %c0_11] : memref<128x128xf32, #tpu.memory_space<vmem>>, vector<128x128xf32>
    %cst_12 = arith.constant dense<0.000000e+00> : vector<8x128xf32>
    %12 = tpu.matmul %10, %11, %cst_12 {dimension_numbers = #tpu.dot_dimension_numbers<[1], [0], [0], [1], [0, 0, 1, 1], [], []>} : vector<8x128xf32>, vector<128x128xf32>, vector<8x128xf32> -> vector<8x128xf32>
    %13 = arith.addf %9, %12 : vector<8x128xf32>
    %c0_13 = arith.constant 0 : index
    %c0_14 = arith.constant 0 : index
    %14 = vector.load %arg9[%c0_13, %c0_14] : memref<8x128xf32, #tpu.memory_space<vmem>>, vector<8x128xf32>
    tpu.vector_store %arg9[%c0_13, %c0_14], %13 {strides = array<i32>} : memref<8x128xf32, #tpu.memory_space<vmem>>, vector<8x128xf32>,
    %c0_i32_15 = arith.constant 0 : i32
    %15 = arith.cmpi eq, %arg2, %c0_i32_15 : i32
    %16 = arith.extui %15 : i1 to i32
    %c0_i32_16 = arith.constant 0 : i32
    %17 = arith.cmpi ne, %16, %c0_i32_16 : i32
    scf.if %17 {
      %c0_17 = arith.constant 0 : index
      %c0_18 = arith.constant 0 : index
      %18 = vector.load %arg6[%c0_17, %c0_18] : memref<3x128xf32, #tpu.memory_space<vmem>>, vector<3x128xf32>
      %c0_19 = arith.constant 0 : index
      %c0_20 = arith.constant 0 : index
      %19 = vector.load %arg8[%c0_19, %c0_20] : memref<8x128xf32, #tpu.memory_space<vmem>>, vector<8x128xf32>
      %20 = vector.extract_strided_slice %18 {offsets = [0, 0], sizes = [1, 128], strides = [1, 1]} : vector<3x128xf32> to vector<1x128xf32>
      %21 = vector.broadcast %20 : vector<1x128xf32> to vector<8x128xf32>
      %22 = arith.addf %19, %21 : vector<8x128xf32>
      %c0_21 = arith.constant 0 : index
      %c0_22 = arith.constant 0 : index
      %23 = vector.load %arg9[%c0_21, %c0_22] : memref<8x128xf32, #tpu.memory_space<vmem>>, vector<8x128xf32>
      %24 = vector.extract_strided_slice %18 {offsets = [1, 0], sizes = [1, 128], strides = [1, 1]} : vector<3x128xf32> to vector<1x128xf32>
      %25 = vector.broadcast %24 : vector<1x128xf32> to vector<8x128xf32>
      %26 = arith.addf %23, %25 : vector<8x128xf32>
      %cst_23 = arith.constant 0.000000e+00 : f32
      %27 = vector.broadcast %cst_23 : f32 to vector<8x128xf32>
      %28 = arith.maximumf %26, %27 : vector<8x128xf32>
      %29 = math.sqrt %28 : vector<8x128xf32>
      %30 = vector.extract_strided_slice %18 {offsets = [2, 0], sizes = [1, 128], strides = [1, 1]} : vector<3x128xf32> to vector<1x128xf32>
      %31 = vector.broadcast %30 : vector<1x128xf32> to vector<8x128xf32>
      %32 = arith.mulf %29, %31 : vector<8x128xf32>
      %33 = arith.addf %22, %32 : vector<8x128xf32>
      %c0_24 = arith.constant 0 : index
      %c0_25 = arith.constant 0 : index
      %34 = vector.load %arg7[%c0_24, %c0_25] : memref<8x128xf32, #tpu.memory_space<vmem>>, vector<8x128xf32>
      tpu.vector_store %arg7[%c0_24, %c0_25], %33 {strides = array<i32>} : memref<8x128xf32, #tpu.memory_space<vmem>>, vector<8x128xf32>,
    } else {
    }
    return
  }
  func.func @transform_0(%arg0: i32, %arg1: i32, %arg2: i32) -> (i32, i32) {
    %c0_i32 = arith.constant 0 : i32
    return %arg0, %arg2 : i32, i32
  }
  func.func @transform_1(%arg0: i32, %arg1: i32, %arg2: i32) -> (i32, i32) {
    %c0_i32 = arith.constant 0 : i32
    return %arg2, %arg1 : i32, i32
  }
  func.func @transform_2(%arg0: i32, %arg1: i32, %arg2: i32) -> (i32, i32) {
    %c0_i32 = arith.constant 0 : i32
    return %arg2, %arg1 : i32, i32
  }
  func.func @transform_3(%arg0: i32, %arg1: i32, %arg2: i32) -> (i32, i32) {
    %c0_i32 = arith.constant 0 : i32
    %c0_i32_0 = arith.constant 0 : i32
    return %c0_i32, %arg1 : i32, i32
  }
  func.func @transform_4(%arg0: i32, %arg1: i32, %arg2: i32) -> (i32, i32) {
    %c0_i32 = arith.constant 0 : i32
    return %arg0, %arg1 : i32, i32
  }
}

</mosaic_0001>

<llo_original>
// kernel: tpu_custom_call.1
$region0: #{tpu_custom_call.1}
  #allocation0 [shape = 'u32[]', space=smem, size = 0x4, offset = 0x4, fixed_abs, tag = 'smem constant byte address 0x4 - core index']
  #allocation1 [shape = 'u32[144,128]{1,0:T(1,128)}', space=vmem, size = 0x12000, scoped, tag = 'internal scratch']
  #allocation2 [shape = 'f32[8,128]{1,0:T(8,128)}', space=vmem, size = 0x1000, scoped, tag = 'scratch operand']
  #allocation3 [shape = 'f32[8,128]{1,0:T(8,128)}', space=vmem, size = 0x1000, scoped, tag = 'scratch operand']
  %s0 = inlined_call_operand.hbm [shape: f32[8,128], index: 0, kind: input, shape index: {}]
  %s1 = inlined_call_operand.hbm [shape: f32[128,128], index: 1, kind: input, shape index: {}]
  %s2 = inlined_call_operand.hbm [shape: f32[128,128], index: 2, kind: input, shape index: {}]
  %s3 = inlined_call_operand.vmem [shape: f32[3,128], index: 3, kind: input, shape index: {}]
  %s4 = inlined_call_operand.hbm [shape: f32[8,128], index: 4, kind: output, shape index: {}]
  %s5 = sld [smem:[#allocation0]]
  $region46: #{tpu_custom_call.1} parent=0
    _
  %s7 = ssub.s32 1, %s5
  %s8 = scalar_select 0, %s7, %s5
  $region1: #{tpu_custom_call.1} parent=0
    #allocation4 [shape = 'u8[4096]{0}', space=vmem, size = 0x1000, scoped, tag = 'input window, operand 0, single buffered']
    #allocation5 [shape = 's32[1]{0}', space=sflag, size = 0x4, scoped, tag = 'scoped memory for tpu_custom_call.1']
    #allocation6 [shape = 's32[1]{0}', space=sflag, size = 0x4, scoped, tag = 'scoped memory for tpu_custom_call.1']
    #allocation7 [shape = 'u8[65536]{0}', space=vmem, size = 0x10000, scoped, tag = 'input window, operand 1, single buffered']
    #allocation8 [shape = 's32[1]{0}', space=sflag, size = 0x4, scoped, tag = 'scoped memory for tpu_custom_call.1']
    #allocation9 [shape = 'u8[65536]{0}', space=vmem, size = 0x10000, scoped, tag = 'input window, operand 2, single buffered']
    #allocation10 [shape = 'u8[4096]{0}', space=vmem, size = 0x1000, scoped, tag = 'output window, operand 0, single buffered']
    %9 = vsyncpa [#allocation5], 0
    %10 = vsyncpa [#allocation8], 0
    %11 = vsyncpa [#allocation6], 0
    // Predicated region
    $region2: #{tpu_custom_call.1} parent=1 // pred_check
      _
    $region3: #{tpu_custom_call.1} parent=1 // pred_check_branch
      %13 = sbr.rel (0) target = $region5
    $region4: #{tpu_custom_call.1} parent=1 // pred_region
      %s15 = ssub.s32 128, 128
      %16 = vsyncadd [#allocation5], %s15
      %s18 = sshll.u32 [#allocation4], 4
      %s19 = int_to_ptr.vmem [resolvable:$true] %s18
      %21 = dma.hbm_to_vmem [thread:$0]  %s0, 128, %s19, [#allocation5]
    $region5: #{tpu_custom_call.1} parent=1 // pred_fallthru
      _
    // Predicated region
    $region6: #{tpu_custom_call.1} parent=1 // pred_check
      _
    $region7: #{tpu_custom_call.1} parent=1 // pred_check_branch
      %23 = sbr.rel (0) target = $region9
    $region8: #{tpu_custom_call.1} parent=1 // pred_region
      %s25 = ssub.s32 2048, 2048
      %26 = vsyncadd [#allocation8], %s25
      %s27 = sshll.u32 [#allocation7], 4
      %s28 = int_to_ptr.vmem [resolvable:$true] %s27
      %33 = dma.hbm_to_vmem [thread:$0]  %s1, 2048, %s28, [#allocation8], 128, 128, 8
    $region9: #{tpu_custom_call.1} parent=1 // pred_fallthru
      _
    // Predicated region
    $region10: #{tpu_custom_call.1} parent=1 // pred_check
      _
    $region11: #{tpu_custom_call.1} parent=1 // pred_check_branch
      %35 = sbr.rel (0) target = $region13
    $region12: #{tpu_custom_call.1} parent=1 // pred_region
      %s37 = ssub.s32 2048, 2048
      %38 = vsyncadd [#allocation8], %s37
      %s39 = sshll.u32 [#allocation9], 4
      %s40 = int_to_ptr.vmem [resolvable:$true] %s39
      %45 = dma.hbm_to_vmem [thread:$0]  %s2, 2048, %s40, [#allocation8], 128, 128, 8
    $region13: #{tpu_custom_call.1} parent=1 // pred_fallthru
      _
    // Predicated region
    $region14: #{tpu_custom_call.1} parent=1 // pred_check
      _
    $region15: #{tpu_custom_call.1} parent=1 // pred_check_branch
      %47 = sbr.rel (0) target = $region17
    $region16: #{tpu_custom_call.1} parent=1 // pred_region
      _
    $region17: #{tpu_custom_call.1} parent=1 // pred_fallthru
      _
    // Predicated region
    $region18: #{tpu_custom_call.1} parent=1 // pred_check
      _
    $region19: #{tpu_custom_call.1} parent=1 // pred_check_branch
      %49 = sbr.rel (0) target = $region21
    $region20: #{tpu_custom_call.1} parent=1 // pred_region
      %50 = dma.done [#allocation5], 128
    $region21: #{tpu_custom_call.1} parent=1 // pred_fallthru
      _
    // Predicated region
    $region22: #{tpu_custom_call.1} parent=1 // pred_check
      _
    $region23: #{tpu_custom_call.1} parent=1 // pred_check_branch
      %52 = sbr.rel (0) target = $region25
    $region24: #{tpu_custom_call.1} parent=1 // pred_region
      %53 = dma.done [#allocation8], 2048
    $region25: #{tpu_custom_call.1} parent=1 // pred_fallthru
      _
    // Predicated region
    $region26: #{tpu_custom_call.1} parent=1 // pred_check
      _
    $region27: #{tpu_custom_call.1} parent=1 // pred_check_branch
      %55 = sbr.rel (0) target = $region29
    $region28: #{tpu_custom_call.1} parent=1 // pred_region
      %56 = dma.done [#allocation8], 2048
    $region29: #{tpu_custom_call.1} parent=1 // pred_fallthru
      _
    %p57 = scmp.eq.s32.totalorder 0, 0
    // Predicated region
    $region30: #{tpu_custom_call.1} parent=1 // pred_check
      %p58 = pneg %p57
    $region31: #{tpu_custom_call.1} parent=1 // pred_check_branch
      %60 = sbr.rel (%p58) target = $region33
    $region32: #{tpu_custom_call.1} parent=1 // pred_region
      %61 = vst [vmem:[#allocation2] sm:$0xff] 0.0
      %62 = vst [vmem:[#allocation3] sm:$0xff] 0.0
    $region33: #{tpu_custom_call.1} parent=1 // pred_fallthru
      _
    %v63 = vld [vmem:[#allocation4] sm:$0xff]
    %v64 = vld [vmem:[#allocation2] sm:$0xff]
    %v65 = vld [vmem:[#allocation7] sm:$0xff]
    %v66 = vld [vmem:[#allocation7 + $0x8] sm:$0xff]
    %v67 = vld [vmem:[#allocation7 + $0x10] sm:$0xff]
    %v68 = vld [vmem:[#allocation7 + $0x18] sm:$0xff]
    %v69 = vld [vmem:[#allocation7 + $0x20] sm:$0xff]
    %v70 = vld [vmem:[#allocation7 + $0x28] sm:$0xff]
    %v71 = vld [vmem:[#allocation7 + $0x30] sm:$0xff]
    %v72 = vld [vmem:[#allocation7 + $0x38] sm:$0xff]
    %v73 = vld [vmem:[#allocation7 + $0x40] sm:$0xff]
    %v74 = vld [vmem:[#allocation7 + $0x48] sm:$0xff]
    %v75 = vld [vmem:[#allocation7 + $0x50] sm:$0xff]
    %v76 = vld [vmem:[#allocation7 + $0x58] sm:$0xff]
    %v77 = vld [vmem:[#allocation7 + $0x60] sm:$0xff]
    %v78 = vld [vmem:[#allocation7 + $0x68] sm:$0xff]
    %v79 = vld [vmem:[#allocation7 + $0x70] sm:$0xff]
    %v80 = vld [vmem:[#allocation7 + $0x78] sm:$0xff]
    %81 = vmatprep.subr.mxu0 0.0
    %82 = vmatpush1.msra.mxu0 %v65
    %83 = vmatprep.subr.mxu0 0.0
    %84 = vmatpush1.msra.mxu0 %v66
    %85 = vmatprep.subr.mxu0 0.0
    %86 = vmatpush1.msra.mxu0 %v67
    %87 = vmatprep.subr.mxu0 0.0
    %88 = vmatpush1.msra.mxu0 %v68
    %89 = vmatprep.subr.mxu0 0.0
    %90 = vmatpush1.msra.mxu0 %v69
    %91 = vmatprep.subr.mxu0 0.0
    %92 = vmatpush1.msra.mxu0 %v70
    %93 = vmatprep.subr.mxu0 0.0
    %94 = vmatpush1.msra.mxu0 %v71
    %95 = vmatprep.subr.mxu0 0.0
    %96 = vmatpush1.msra.mxu0 %v72
    %97 = vmatprep.subr.mxu0 0.0
    %98 = vmatpush1.msra.mxu0 %v73
    %99 = vmatprep.subr.mxu0 0.0
    %100 = vmatpush1.msra.mxu0 %v74
    %101 = vmatprep.subr.mxu0 0.0
    %102 = vmatpush1.msra.mxu0 %v75
    %103 = vmatprep.subr.mxu0 0.0
    %104 = vmatpush1.msra.mxu0 %v76
    %105 = vmatprep.subr.mxu0 0.0
    %106 = vmatpush1.msra.mxu0 %v77
    %107 = vmatprep.subr.mxu0 0.0
    %108 = vmatpush1.msra.mxu0 %v78
    %109 = vmatprep.subr.mxu0 0.0
    %110 = vmatpush1.msra.mxu0 %v79
    %111 = vmatprep.subr.mxu0 0.0
    %112 = vmatpush1.msra.mxu0 %v80
    %113 = vmatprep.subr.mxu0 0.0
    %114 = vmatpush1.msra.mxu0 0.0
    %115 = vmatprep.subr.mxu0 0.0
    %116 = vmatpush1.msra.mxu0 0.0
    %117 = vmatprep.subr.mxu0 0.0
    %118 = vmatpush1.msra.mxu0 0.0
    %119 = vmatprep.subr.mxu0 0.0
    %120 = vmatpush1.msra.mxu0 0.0
    %121 = vmatprep.subr.mxu0 0.0
    %122 = vmatpush1.msra.mxu0 0.0
    %123 = vmatprep.subr.mxu0 0.0
    %124 = vmatpush1.msra.mxu0 0.0
    %125 = vmatprep.subr.mxu0 0.0
    %126 = vmatpush1.msra.mxu0 0.0
    %127 = vmatprep.subr.mxu0 0.0
    %128 = vmatpush1.msra.mxu0 0.0
    %129 = vmatprep.subr.mxu0 0.0
    %130 = vmatpush1.msra.mxu0 0.0
    %131 = vmatprep.subr.mxu0 0.0
    %132 = vmatpush1.msra.mxu0 0.0
    %133 = vmatprep.subr.mxu0 0.0
    %134 = vmatpush1.msra.mxu0 0.0
    %135 = vmatprep.subr.mxu0 0.0
    %136 = vmatpush1.msra.mxu0 0.0
    %137 = vmatprep.subr.mxu0 0.0
    %138 = vmatpush1.msra.mxu0 0.0
    %139 = vmatprep.subr.mxu0 0.0
    %140 = vmatpush1.msra.mxu0 0.0
    %141 = vmatprep.subr.mxu0 0.0
    %142 = vmatpush1.msra.mxu0 0.0
    %143 = vmatprep.subr.mxu0 0.0
    %144 = vmatpush1.msra.mxu0 0.0
    %145 = vmatprep.mubr.f32.mxu0 0.0
    %146 = vmatmul.mubr.f32.gmra.mrb[0].mxu0 %v63
    %v147 = vpop.f32.mrb[0].mxu0
    %v148 = vadd.f32 0.0, %v147
    %v149 = vpop.f32.mrb[0].mxu0
    %150 = vdwg.mxu0
    %v151 = vadd.f32 %v64, %v148
    %152 = vst [vmem:[#allocation2] sm:$0xff] %v151
    %v153 = vld [vmem:[#allocation3] sm:$0xff]
    %v154 = vmul.f32 %v63, %v63
    %v155 = vld [vmem:[#allocation9] sm:$0xff]
    %v156 = vld [vmem:[#allocation9 + $0x8] sm:$0xff]
    %v157 = vld [vmem:[#allocation9 + $0x10] sm:$0xff]
    %v158 = vld [vmem:[#allocation9 + $0x18] sm:$0xff]
    %v159 = vld [vmem:[#allocation9 + $0x20] sm:$0xff]
    %v160 = vld [vmem:[#allocation9 + $0x28] sm:$0xff]
    %v161 = vld [vmem:[#allocation9 + $0x30] sm:$0xff]
    %v162 = vld [vmem:[#allocation9 + $0x38] sm:$0xff]
    %v163 = vld [vmem:[#allocation9 + $0x40] sm:$0xff]
    %v164 = vld [vmem:[#allocation9 + $0x48] sm:$0xff]
    %v165 = vld [vmem:[#allocation9 + $0x50] sm:$0xff]
    %v166 = vld [vmem:[#allocation9 + $0x58] sm:$0xff]
    %v167 = vld [vmem:[#allocation9 + $0x60] sm:$0xff]
    %v168 = vld [vmem:[#allocation9 + $0x68] sm:$0xff]
    %v169 = vld [vmem:[#allocation9 + $0x70] sm:$0xff]
    %v170 = vld [vmem:[#allocation9 + $0x78] sm:$0xff]
    %171 = vmatprep.subr.mxu0 0.0
    %172 = vmatpush1.msra.mxu0 %v155
    %173 = vmatprep.subr.mxu0 0.0
    %174 = vmatpush1.msra.mxu0 %v156
    %175 = vmatprep.subr.mxu0 0.0
    %176 = vmatpush1.msra.mxu0 %v157
    %177 = vmatprep.subr.mxu0 0.0
    %178 = vmatpush1.msra.mxu0 %v158
    %179 = vmatprep.subr.mxu0 0.0
    %180 = vmatpush1.msra.mxu0 %v159
    %181 = vmatprep.subr.mxu0 0.0
    %182 = vmatpush1.msra.mxu0 %v160
    %183 = vmatprep.subr.mxu0 0.0
    %184 = vmatpush1.msra.mxu0 %v161
    %185 = vmatprep.subr.mxu0 0.0
    %186 = vmatpush1.msra.mxu0 %v162
    %187 = vmatprep.subr.mxu0 0.0
    %188 = vmatpush1.msra.mxu0 %v163
    %189 = vmatprep.subr.mxu0 0.0
    %190 = vmatpush1.msra.mxu0 %v164
    %191 = vmatprep.subr.mxu0 0.0
    %192 = vmatpush1.msra.mxu0 %v165
    %193 = vmatprep.subr.mxu0 0.0
    %194 = vmatpush1.msra.mxu0 %v166
    %195 = vmatprep.subr.mxu0 0.0
    %196 = vmatpush1.msra.mxu0 %v167
    %197 = vmatprep.subr.mxu0 0.0
    %198 = vmatpush1.msra.mxu0 %v168
    %199 = vmatprep.subr.mxu0 0.0
    %200 = vmatpush1.msra.mxu0 %v169
    %201 = vmatprep.subr.mxu0 0.0
    %202 = vmatpush1.msra.mxu0 %v170
    %203 = vmatprep.subr.mxu0 0.0
    %204 = vmatpush1.msra.mxu0 0.0
    %205 = vmatprep.subr.mxu0 0.0
    %206 = vmatpush1.msra.mxu0 0.0
    %207 = vmatprep.subr.mxu0 0.0
    %208 = vmatpush1.msra.mxu0 0.0
    %209 = vmatprep.subr.mxu0 0.0
    %210 = vmatpush1.msra.mxu0 0.0
    %211 = vmatprep.subr.mxu0 0.0
    %212 = vmatpush1.msra.mxu0 0.0
    %213 = vmatprep.subr.mxu0 0.0
    %214 = vmatpush1.msra.mxu0 0.0
    %215 = vmatprep.subr.mxu0 0.0
    %216 = vmatpush1.msra.mxu0 0.0
    %217 = vmatprep.subr.mxu0 0.0
    %218 = vmatpush1.msra.mxu0 0.0
    %219 = vmatprep.subr.mxu0 0.0
    %220 = vmatpush1.msra.mxu0 0.0
    %221 = vmatprep.subr.mxu0 0.0
    %222 = vmatpush1.msra.mxu0 0.0
    %223 = vmatprep.subr.mxu0 0.0
    %224 = vmatpush1.msra.mxu0 0.0
    %225 = vmatprep.subr.mxu0 0.0
    %226 = vmatpush1.msra.mxu0 0.0
    %227 = vmatprep.subr.mxu0 0.0
    %228 = vmatpush1.msra.mxu0 0.0
    %229 = vmatprep.subr.mxu0 0.0
    %230 = vmatpush1.msra.mxu0 0.0
    %231 = vmatprep.subr.mxu0 0.0
    %232 = vmatpush1.msra.mxu0 0.0
    %233 = vmatprep.subr.mxu0 0.0
    %234 = vmatpush1.msra.mxu0 0.0
    %235 = vmatprep.mubr.f32.mxu0 0.0
    %236 = vmatmul.mubr.f32.gmra.mrb[0].mxu0 %v154
    %v237 = vpop.f32.mrb[0].mxu0
    %v238 = vadd.f32 0.0, %v237
    %v239 = vpop.f32.mrb[0].mxu0
    %240 = vdwg.mxu0
    %v241 = vadd.f32 %v153, %v238
    %242 = vst [vmem:[#allocation3] sm:$0xff] %v241
    // Predicated region
    $region34: #{tpu_custom_call.1} parent=1 // pred_check
      %p243 = pneg %p57
    $region35: #{tpu_custom_call.1} parent=1 // pred_check_branch
      %245 = sbr.rel (%p243) target = $region37
    $region36: #{tpu_custom_call.1} parent=1 // pred_region
      %v246 = vld [vmem:[%s3] sm:$0x7]
      %v247 = vld [vmem:[#allocation2] sm:$0xff]
      %v248 = vlaneseq
      %v249 = vshrl.u32 %v248, 7
      %v250 = vsub.s32 0, %v249
      %v251 = vrot.slane %v246, %v250
      %v252 = vadd.f32 %v247, %v251
      %v253 = vld [vmem:[#allocation3] sm:$0xff]
      %v254 = vlaneseq
      %v255 = vshrl.u32 %v254, 7
      %v256 = vsub.s32 1, %v255
      %v257 = vrot.slane %v246, %v256
      %v258 = vadd.f32 %v253, %v257
      %v259 = vmax.f32 %v258, 0.0
      %v260 = vrsqrt.pop %v259
      %v261 = vmul.f32 %v259, %v260
      %vm262 = vcmp.eq.f32.partialorder %v259, inf
      %v263 = vsel %vm262, %v259, %v261
      %vm264 = vcmp.eq.f32.partialorder %v259, 0.0
      %v265 = vand.u32 %v259, 2147483648
      %v266 = vsel %vm264, %v265, %v263
      %v267 = vlaneseq
      %v268 = vshrl.u32 %v267, 7
      %v269 = vsub.s32 2, %v268
      %v270 = vrot.slane %v246, %v269
      %v271 = vmul.f32 %v266, %v270
      %v272 = vadd.f32 %v252, %v271
      %273 = vst [vmem:[#allocation10] sm:$0xff] %v272
    $region37: #{tpu_custom_call.1} parent=1 // pred_fallthru
      _
    // Predicated region
    $region38: #{tpu_custom_call.1} parent=1 // pred_check
      _
    $region39: #{tpu_custom_call.1} parent=1 // pred_check_branch
      %275 = sbr.rel (0) target = $region41
    $region40: #{tpu_custom_call.1} parent=1 // pred_region
      %s277 = ssub.s32 128, 128
      %278 = vsyncadd [#allocation6], %s277
      %s280 = sshll.u32 [#allocation10], 4
      %s281 = int_to_ptr.vmem [resolvable:$true] %s280
      %283 = dma.vmem_to_hbm [thread:$0]  %s281, 128, %s4, [#allocation6]
    $region41: #{tpu_custom_call.1} parent=1 // pred_fallthru
      _
    // Predicated region
    $region42: #{tpu_custom_call.1} parent=1 // pred_check
      _
    $region43: #{tpu_custom_call.1} parent=1 // pred_check_branch
      %285 = sbr.rel (0) target = $region45
    $region44: #{tpu_custom_call.1} parent=1 // pred_region
      %286 = dma.done [#allocation6], 128
    $region45: #{tpu_custom_call.1} parent=1 // pred_fallthru
      _
    %287 = vsyncpa [#allocation5], 1
    %288 = vsyncpa [#allocation8], 1
    %289 = vsyncpa [#allocation6], 1

</llo_original>
